<compile_context>
chip_gen: v7x
topology: tpu7x:2x2x1
jax: 0.10.0
libtpu: 0.0.40
codegen_flags: <defaults>
</compile_context>

<pallas_src>
import jax
import jax.numpy as jnp
from jax.experimental import pallas as pl
from jax.experimental.pallas import tpu as pltpu


def _cdiv(a, b):
    return (a + b - 1) // b


def _round_up(x, m):
    return ((x + m - 1) // m) * m


def ntm_kernel(doc_ref, w_ref, b_ref, t_ref, rec_ref):
    # Cast the streamed activation tile to bf16 in-kernel (no wrapper pre-pass).
    doc = doc_ref[...].astype(jnp.bfloat16)
    # Linear layer: [TB, H](bf16) @ [H, K](bf16) -> f32 acc, + f32 bias.
    logits = jnp.dot(doc, w_ref[...],
                     preferred_element_type=jnp.float32) + b_ref[...]
    # Numerically-stable softmax over the topic axis, all in f32.
    m = jnp.max(logits, axis=-1, keepdims=True)
    e = jnp.exp(logits - m)
    inv = pl.reciprocal(jnp.sum(e, axis=-1, keepdims=True), approx=False)
    topic_dist = (e * inv).astype(t_ref.dtype)        # bf16 for the second MXU pass
    # Reconstruction: [TB, K](bf16) @ [K, H](bf16) -> f32 -> output dtype.
    rec_ref[...] = jnp.dot(topic_dist, t_ref[...],
                           preferred_element_type=jnp.float32).astype(rec_ref.dtype)


def neural_topic_model_forward(doc_emb, W, b, topic_embeddings, *, tb=512):
    """Returns (rec_emb, topic_embeddings), matching the PyTorch module.

    W is hid_layer.weight.T (shape [hid_dim, num_topic]); b is hid_layer.bias.
    """
    B, H = doc_emb.shape
    K = W.shape[1]
    bf16 = jnp.bfloat16
    out_dtype = doc_emb.dtype          # bf16 callers get a bf16 writeback

    # Resident operands: one-time tiny cast (negligible vs doc/rec streaming).
    W_bf = W.astype(bf16)                                  # [H, K]
    T_bf = topic_embeddings.astype(bf16)                   # [K, H]
    b2 = b.astype(jnp.float32).reshape(1, K)               # [1, K]

    # ---- VMEM budget, clamped to the actual chip (v7x: 64 MiB / TC) --------
    try:
        vmem_cap = int(pltpu.get_tpu_info().vmem_capacity_bytes)
    except Exception:
        vmem_cap = 64 * 1024 * 1024
    vmem_budget = int(0.9 * vmem_cap)                      # ~10% headroom

    in_bytes = jnp.dtype(doc_emb.dtype).itemsize
    out_bytes = jnp.dtype(out_dtype).itemsize
    resident = (H * K + K * H) * 2 + K * 4                 # bf16 W + T, f32 bias

    def est_vmem(tb_):
        streamed = 2 * tb_ * H * (in_bytes + out_bytes)    # dbl-buffered doc + rec
        temps = 4 * tb_ * K * 4 + 2 * tb_ * H * 4          # logits / softmax / f32 acc
        return resident + streamed + temps

    # ---- batch tile selection ----------------------------------------------
    n_tiles = _cdiv(B, tb)
    if B >= 16:
        n_tiles = max(n_tiles, 2)      # >= 2 grid steps so both v7x TCs get work
    TB = min(_round_up(_cdiv(B, n_tiles), 8), _round_up(B, 8))
    while TB > 8 and est_vmem(TB) > vmem_budget:
        TB = _round_up(TB // 2, 8)
    grid = (_cdiv(B, TB),)             # partial last tile handled by Pallas masking

    vmem_limit = int(min(vmem_budget,
                         max(2 * est_vmem(TB), 16 * 1024 * 1024)))

    cost = pl.CostEstimate(
        flops=2 * B * H * K * 2,                           # two matmuls
        transcendentals=B * K,                             # exp
        bytes_accessed=(B * H * (in_bytes + out_bytes)
                        + (H * K + K * H) * 2 + K * 4),
    )

    def run(single_buffer_residents):
        # Constant index_map => these blocks are never re-fetched; single-buffer
        # them to halve their VMEM footprint (critical for large H*K on v7x).
        res_kwargs = (dict(pipeline_mode=pl.Buffered(1))
                      if single_buffer_residents else {})
        in_specs = [
            pl.BlockSpec((TB, H), lambda i: (i, 0)),                 # doc: streamed
            pl.BlockSpec((H, K), lambda i: (0, 0), **res_kwargs),    # W: resident
            pl.BlockSpec((1, K), lambda i: (0, 0), **res_kwargs),    # bias: resident
            pl.BlockSpec((K, H), lambda i: (0, 0), **res_kwargs),    # topic emb
        ]
        out_spec = pl.BlockSpec((TB, H), lambda i: (i, 0))
        return pl.pallas_call(
            ntm_kernel,
            out_shape=jax.ShapeDtypeStruct((B, H), out_dtype),
            grid=grid,
            in_specs=in_specs,
            out_specs=out_spec,
            compiler_params=pltpu.CompilerParams(
                dimension_semantics=("parallel",),
                vmem_limit_bytes=vmem_limit,
            ),
            cost_estimate=cost,
        )(doc_emb, W_bf, b2, T_bf)

    try:
        rec_emb = run(True)
    except Exception:
        # pipeline_mode=pl.Buffered(1) not supported on this jax build:
        # fall back to default (double-buffered) resident blocks.
        rec_emb = run(False)

    return rec_emb, topic_embeddings


def xavier_uniform(key, shape, dtype=jnp.float32):
    fan_in, fan_out = shape[0], shape[1]
    bound = (6.0 / (fan_in + fan_out)) ** 0.5
    return jax.random.uniform(key, shape, dtype=dtype, minval=-bound, maxval=bound)


if __name__ == "__main__":
    # Small shapes consistent with the module: batch=8, hid_dim=32, num_topic=16.
    # NOTE: purely a correctness demo; the tiling pays off at realistic B/H/K.
    B, HID_DIM, NUM_TOPIC = 8, 32, 16

    key = jax.random.PRNGKey(0)
    k_doc, k_w, k_b, k_t = jax.random.split(key, 4)

    doc_emb = jax.random.normal(k_doc, (B, HID_DIM), dtype=jnp.float32)
    W = xavier_uniform(k_w, (HID_DIM, NUM_TOPIC))          # hid_layer.weight.T
    b = jax.random.uniform(k_b, (NUM_TOPIC,), dtype=jnp.float32,
                           minval=-0.1, maxval=0.1)        # hid_layer.bias
    topic_embeddings = xavier_uniform(k_t, (NUM_TOPIC, HID_DIM))

    rec_emb, topic_emb_out = neural_topic_model_forward(doc_emb, W, b, topic_embeddings)
    rec_emb = jax.block_until_ready(rec_emb)

    # Reference with matching bf16 operand precision (f32 accumulation).
    doc_b = doc_emb.astype(jnp.bfloat16).astype(jnp.float32)
    W_b = W.astype(jnp.bfloat16).astype(jnp.float32)
    T_b = topic_embeddings.astype(jnp.bfloat16).astype(jnp.float32)
    logits = doc_b @ W_b + b
    td = jax.nn.softmax(logits, axis=-1)
    ref_bf16 = (td.astype(jnp.bfloat16).astype(jnp.float32)) @ T_b
    assert jnp.allclose(rec_emb, ref_bf16, atol=1e-2, rtol=1e-2), "mismatch vs bf16 reference"

    # Loose sanity check against the full-f32 PyTorch-semantics reference.
    ref_f32 = jax.nn.softmax(doc_emb @ W + b, axis=-1) @ topic_embeddings
    assert jnp.allclose(rec_emb, ref_f32, atol=5e-2, rtol=5e-2), "mismatch vs f32 reference"

    assert rec_emb.shape == (B, HID_DIM)
    assert topic_emb_out.shape == (NUM_TOPIC, HID_DIM)

    print("KERNEL_OK")
</pallas_src>

<mosaic_0001>
module attributes {stable_mosaic.version = 11 : i64} {
  func.func @ntm_kernel(%arg0: i32, %arg1: memref<8x32xf32, #tpu.memory_space<vmem>>, %arg2: memref<32x16xbf16, #tpu.memory_space<vmem>>, %arg3: memref<1x16xf32, #tpu.memory_space<vmem>>, %arg4: memref<16x32xbf16, #tpu.memory_space<vmem>>, %arg5: memref<8x32xf32, #tpu.memory_space<vmem>>) attributes {dimension_semantics = [#tpu.dimension_semantics<parallel>], iteration_bounds = array<i64: 1>, scalar_prefetch = 0 : i64, scratch_operands = 0 : i64, tpu.core_type = #tpu.core_type<tc>, window_params = [{transform_indices = @transform_0, window_bounds = array<i64: 8, 32>}, {pipeline_mode = #tpu.pipeline_mode<synchronous>, transform_indices = @transform_1, window_bounds = array<i64: 32, 16>}, {pipeline_mode = #tpu.pipeline_mode<synchronous>, transform_indices = @transform_2, window_bounds = array<i64: 1, 16>}, {pipeline_mode = #tpu.pipeline_mode<synchronous>, transform_indices = @transform_3, window_bounds = array<i64: 16, 32>}, {transform_indices = @transform_4, window_bounds = array<i64: 8, 32>}]} {
    %c0 = arith.constant 0 : index
    %c0_0 = arith.constant 0 : index
    %0 = vector.load %arg1[%c0, %c0_0] : memref<8x32xf32, #tpu.memory_space<vmem>>, vector<8x32xf32>
    %1 = arith.truncf %0 : vector<8x32xf32> to vector<8x32xbf16>
    %c0_1 = arith.constant 0 : index
    %c0_2 = arith.constant 0 : index
    %2 = vector.load %arg2[%c0_1, %c0_2] : memref<32x16xbf16, #tpu.memory_space<vmem>>, vector<32x16xbf16>
    %cst = arith.constant dense<0.000000e+00> : vector<8x16xf32>
    %3 = tpu.matmul %1, %2, %cst {dimension_numbers = #tpu.dot_dimension_numbers<[1], [0], [0], [1], [0, 0, 1, 1], [], []>} : vector<8x32xbf16>, vector<32x16xbf16>, vector<8x16xf32> -> vector<8x16xf32>
    %c0_3 = arith.constant 0 : index
    %c0_4 = arith.constant 0 : index
    %4 = vector.load %arg3[%c0_3, %c0_4] : memref<1x16xf32, #tpu.memory_space<vmem>>, vector<1x16xf32>
    %5 = vector.broadcast %4 : vector<1x16xf32> to vector<8x16xf32>
    %6 = arith.addf %3, %5 : vector<8x16xf32>
    %cst_5 = arith.constant dense<0xFF800000> : vector<8xf32>
    %7 = vector.multi_reduction <maximumf>, %6, %cst_5 [1] : vector<8x16xf32> to vector<8xf32>
    %8 = vector.shape_cast %7 : vector<8xf32> to vector<8x1xf32>
    %9 = vector.broadcast %8 : vector<8x1xf32> to vector<8x16xf32>
    %10 = arith.subf %6, %9 : vector<8x16xf32>
    %11 = math.exp %10 : vector<8x16xf32>
    %cst_6 = arith.constant dense<0.000000e+00> : vector<8xf32>
    %12 = vector.multi_reduction <add>, %11, %cst_6 [1] : vector<8x16xf32> to vector<8xf32>
    %13 = vector.shape_cast %12 : vector<8xf32> to vector<8x1xf32>
    %14 = tpu.reciprocal %13 : vector<8x1xf32> -> vector<8x1xf32>
    %15 = vector.broadcast %14 : vector<8x1xf32> to vector<8x16xf32>
    %16 = arith.mulf %11, %15 : vector<8x16xf32>
    %17 = arith.truncf %16 : vector<8x16xf32> to vector<8x16xbf16>
    %c0_7 = arith.constant 0 : index
    %c0_8 = arith.constant 0 : index
    %18 = vector.load %arg4[%c0_7, %c0_8] : memref<16x32xbf16, #tpu.memory_space<vmem>>, vector<16x32xbf16>
    %cst_9 = arith.constant dense<0.000000e+00> : vector<8x32xf32>
    %19 = tpu.matmul %17, %18, %cst_9 {dimension_numbers = #tpu.dot_dimension_numbers<[1], [0], [0], [1], [0, 0, 1, 1], [], []>} : vector<8x16xbf16>, vector<16x32xbf16>, vector<8x32xf32> -> vector<8x32xf32>
    %c0_10 = arith.constant 0 : index
    %c0_11 = arith.constant 0 : index
    %20 = vector.load %arg5[%c0_10, %c0_11] : memref<8x32xf32, #tpu.memory_space<vmem>>, vector<8x32xf32>
    tpu.vector_store %arg5[%c0_10, %c0_11], %19 {strides = array<i32>} : memref<8x32xf32, #tpu.memory_space<vmem>>, vector<8x32xf32>,
    return
  }
  func.func @transform_0(%arg0: i32) -> (i32, i32) {
    %c0_i32 = arith.constant 0 : i32
    %c0_i32_0 = arith.constant 0 : i32
    return %arg0, %c0_i32 : i32, i32
  }
  func.func @transform_1(%arg0: i32) -> (i32, i32) {
    %c0_i32 = arith.constant 0 : i32
    %c0_i32_0 = arith.constant 0 : i32
    %c0_i32_1 = arith.constant 0 : i32
    return %c0_i32, %c0_i32_0 : i32, i32
  }
  func.func @transform_2(%arg0: i32) -> (i32, i32) {
    %c0_i32 = arith.constant 0 : i32
    %c0_i32_0 = arith.constant 0 : i32
    %c0_i32_1 = arith.constant 0 : i32
    return %c0_i32, %c0_i32_0 : i32, i32
  }
  func.func @transform_3(%arg0: i32) -> (i32, i32) {
    %c0_i32 = arith.constant 0 : i32
    %c0_i32_0 = arith.constant 0 : i32
    %c0_i32_1 = arith.constant 0 : i32
    return %c0_i32, %c0_i32_0 : i32, i32
  }
  func.func @transform_4(%arg0: i32) -> (i32, i32) {
    %c0_i32 = arith.constant 0 : i32
    %c0_i32_0 = arith.constant 0 : i32
    return %arg0, %c0_i32 : i32, i32
  }
}

module attributes {stable_mosaic.version = 11 : i64} {
  func.func @ntm_kernel(%arg0: i32, %arg1: memref<8x32xf32, #tpu.memory_space<vmem>>, %arg2: memref<32x16xbf16, #tpu.memory_space<vmem>>, %arg3: memref<1x16xf32, #tpu.memory_space<vmem>>, %arg4: memref<16x32xbf16, #tpu.memory_space<vmem>>, %arg5: memref<8x32xf32, #tpu.memory_space<vmem>>) attributes {dimension_semantics = [#tpu.dimension_semantics<parallel>], iteration_bounds = array<i64: 1>, scalar_prefetch = 0 : i64, scratch_operands = 0 : i64, tpu.core_type = #tpu.core_type<tc>, window_params = [{transform_indices = @transform_0, window_bounds = array<i64: 8, 32>}, {pipeline_mode = #tpu.pipeline_mode<synchronous>, transform_indices = @transform_1, window_bounds = array<i64: 32, 16>}, {pipeline_mode = #tpu.pipeline_mode<synchronous>, transform_indices = @transform_2, window_bounds = array<i64: 1, 16>}, {pipeline_mode = #tpu.pipeline_mode<synchronous>, transform_indices = @transform_3, window_bounds = array<i64: 16, 32>}, {transform_indices = @transform_4, window_bounds = array<i64: 8, 32>}]} {
    %c0 = arith.constant 0 : index
    %c0_0 = arith.constant 0 : index
    %0 = vector.load %arg1[%c0, %c0_0] : memref<8x32xf32, #tpu.memory_space<vmem>>, vector<8x32xf32>
    %1 = arith.truncf %0 : vector<8x32xf32> to vector<8x32xbf16>
    %c0_1 = arith.constant 0 : index
    %c0_2 = arith.constant 0 : index
    %2 = vector.load %arg2[%c0_1, %c0_2] : memref<32x16xbf16, #tpu.memory_space<vmem>>, vector<32x16xbf16>
    %cst = arith.constant dense<0.000000e+00> : vector<8x16xf32>
    %3 = tpu.matmul %1, %2, %cst {dimension_numbers = #tpu.dot_dimension_numbers<[1], [0], [0], [1], [0, 0, 1, 1], [], []>} : vector<8x32xbf16>, vector<32x16xbf16>, vector<8x16xf32> -> vector<8x16xf32>
    %c0_3 = arith.constant 0 : index
    %c0_4 = arith.constant 0 : index
    %4 = vector.load %arg3[%c0_3, %c0_4] : memref<1x16xf32, #tpu.memory_space<vmem>>, vector<1x16xf32>
    %5 = vector.broadcast %4 : vector<1x16xf32> to vector<8x16xf32>
    %6 = arith.addf %3, %5 : vector<8x16xf32>
    %cst_5 = arith.constant dense<0xFF800000> : vector<8xf32>
    %7 = vector.multi_reduction <maximumf>, %6, %cst_5 [1] : vector<8x16xf32> to vector<8xf32>
    %8 = vector.shape_cast %7 : vector<8xf32> to vector<8x1xf32>
    %9 = vector.broadcast %8 : vector<8x1xf32> to vector<8x16xf32>
    %10 = arith.subf %6, %9 : vector<8x16xf32>
    %11 = math.exp %10 : vector<8x16xf32>
    %cst_6 = arith.constant dense<0.000000e+00> : vector<8xf32>
    %12 = vector.multi_reduction <add>, %11, %cst_6 [1] : vector<8x16xf32> to vector<8xf32>
    %13 = vector.shape_cast %12 : vector<8xf32> to vector<8x1xf32>
    %14 = tpu.reciprocal %13 : vector<8x1xf32> -> vector<8x1xf32>
    %15 = vector.broadcast %14 : vector<8x1xf32> to vector<8x16xf32>
    %16 = arith.mulf %11, %15 : vector<8x16xf32>
    %17 = arith.truncf %16 : vector<8x16xf32> to vector<8x16xbf16>
    %c0_7 = arith.constant 0 : index
    %c0_8 = arith.constant 0 : index
    %18 = vector.load %arg4[%c0_7, %c0_8] : memref<16x32xbf16, #tpu.memory_space<vmem>>, vector<16x32xbf16>
    %cst_9 = arith.constant dense<0.000000e+00> : vector<8x32xf32>
    %19 = tpu.matmul %17, %18, %cst_9 {dimension_numbers = #tpu.dot_dimension_numbers<[1], [0], [0], [1], [0, 0, 1, 1], [], []>} : vector<8x16xbf16>, vector<16x32xbf16>, vector<8x32xf32> -> vector<8x32xf32>
    %c0_10 = arith.constant 0 : index
    %c0_11 = arith.constant 0 : index
    %20 = vector.load %arg5[%c0_10, %c0_11] : memref<8x32xf32, #tpu.memory_space<vmem>>, vector<8x32xf32>
    tpu.vector_store %arg5[%c0_10, %c0_11], %19 {strides = array<i32>} : memref<8x32xf32, #tpu.memory_space<vmem>>, vector<8x32xf32>,
    return
  }
  func.func @transform_0(%arg0: i32) -> (i32, i32) {
    %c0_i32 = arith.constant 0 : i32
    %c0_i32_0 = arith.constant 0 : i32
    return %arg0, %c0_i32 : i32, i32
  }
  func.func @transform_1(%arg0: i32) -> (i32, i32) {
    %c0_i32 = arith.constant 0 : i32
    %c0_i32_0 = arith.constant 0 : i32
    %c0_i32_1 = arith.constant 0 : i32
    return %c0_i32, %c0_i32_0 : i32, i32
  }
  func.func @transform_2(%arg0: i32) -> (i32, i32) {
    %c0_i32 = arith.constant 0 : i32
    %c0_i32_0 = arith.constant 0 : i32
    %c0_i32_1 = arith.constant 0 : i32
    return %c0_i32, %c0_i32_0 : i32, i32
  }
  func.func @transform_3(%arg0: i32) -> (i32, i32) {
    %c0_i32 = arith.constant 0 : i32
    %c0_i32_0 = arith.constant 0 : i32
    %c0_i32_1 = arith.constant 0 : i32
    return %c0_i32, %c0_i32_0 : i32, i32
  }
  func.func @transform_4(%arg0: i32) -> (i32, i32) {
    %c0_i32 = arith.constant 0 : i32
    %c0_i32_0 = arith.constant 0 : i32
    return %arg0, %c0_i32 : i32, i32
  }
}

</mosaic_0001>

<llo_original>
// kernel: tpu_custom_call.1
$region0: #{tpu_custom_call.1}
  #allocation0 [shape = 'u32[]', space=smem, size = 0x4, offset = 0x4, fixed_abs, tag = 'smem constant byte address 0x4 - core index']
  #allocation1 [shape = 'u32[144,128]{1,0:T(1,128)}', space=vmem, size = 0x12000, scoped, tag = 'internal scratch']
  %s0 = inlined_call_operand.vmem [shape: f32[8,32], index: 0, kind: input, shape index: {}]
  %s1 = inlined_call_operand.vmem [shape: bf16[32,16], index: 1, kind: input, shape index: {}]
  %s2 = inlined_call_operand.vmem [shape: f32[1,16], index: 2, kind: input, shape index: {}]
  %s3 = inlined_call_operand.vmem [shape: bf16[16,32], index: 3, kind: input, shape index: {}]
  %s4 = inlined_call_operand.hbm [shape: f32[8,32], index: 4, kind: output, shape index: {}]
  %s5 = sld [smem:[#allocation0]]
  $region26: #{tpu_custom_call.1} parent=0
    _
  %s7 = ssub.s32 1, %s5
  %s8 = scalar_select 0, %s7, %s5
  $region1: #{tpu_custom_call.1} parent=0
    #allocation2 [shape = 'u8[4096]{0}', space=vmem, size = 0x1000, scoped, tag = 'output window, operand 0, single buffered']
    #allocation3 [shape = 's32[1]{0}', space=sflag, size = 0x4, scoped, tag = 'scoped memory for tpu_custom_call.1']
    %9 = vsyncpa [#allocation3], 0
    // Predicated region
    $region2: #{tpu_custom_call.1} parent=1 // pred_check
      _
    $region3: #{tpu_custom_call.1} parent=1 // pred_check_branch
      %11 = sbr.rel (0) target = $region5
    $region4: #{tpu_custom_call.1} parent=1 // pred_region
      _
    $region5: #{tpu_custom_call.1} parent=1 // pred_fallthru
      _
    // Predicated region
    $region6: #{tpu_custom_call.1} parent=1 // pred_check
      _
    $region7: #{tpu_custom_call.1} parent=1 // pred_check_branch
      %13 = sbr.rel (0) target = $region9
    $region8: #{tpu_custom_call.1} parent=1 // pred_region
      _
    $region9: #{tpu_custom_call.1} parent=1 // pred_fallthru
      _
    // Predicated region
    $region10: #{tpu_custom_call.1} parent=1 // pred_check
      _
    $region11: #{tpu_custom_call.1} parent=1 // pred_check_branch
      %15 = sbr.rel (0) target = $region13
    $region12: #{tpu_custom_call.1} parent=1 // pred_region
      _
    $region13: #{tpu_custom_call.1} parent=1 // pred_fallthru
      _
    // Predicated region
    $region14: #{tpu_custom_call.1} parent=1 // pred_check
      _
    $region15: #{tpu_custom_call.1} parent=1 // pred_check_branch
      %17 = sbr.rel (0) target = $region17
    $region16: #{tpu_custom_call.1} parent=1 // pred_region
      _
    $region17: #{tpu_custom_call.1} parent=1 // pred_fallthru
      _
    %v19 = vld [vmem:[%s0] sm:$0xff]
    %v20 = vpack.c.bf16 %v19, %v19
    %v21 = vld [vmem:[%s1] sm:$0xf]
    %v22 = vld [vmem:[%s1 + $0x4] sm:$0xf]
    %v23 = vld [vmem:[%s1 + $0x8] sm:$0xf]
    %v24 = vld [vmem:[%s1 + $0xc] sm:$0xf]
    %v25 = vld [vmem:[%s2] sm:$0x1]
    %v27 = vlaneseq
    %v28 = vshrl.u32 %v27, 7
    %v29 = vsub.s32 0, %v28
    %v30 = vrot.slane %v25, %v29
    %v36 = vunpack.c.l.b16 %v21
    %v37 = vunpack.c.l.b16 %v22
    %v38 = vunpack.c.l.b16 %v23
    %v39 = vunpack.c.l.b16 %v24
    %v40 = vpack.c.b16 %v37, %v36
    %v41 = vpack.c.b16 %v39, %v38
    %vm44 = vcmask 261120
    %v46 = vsel %vm44, %v20, 0
    %48 = vmatprep.subr.bf16.mxu0 0
    %49 = vmatpush1.bf16.msra.mxu0 %v40
    %50 = vmatprep.subr.bf16.mxu0 0
    %51 = vmatpush1.bf16.msra.mxu0 %v41
    %52 = vmatprep.subr.bf16.mxu0 0
    %53 = vmatpush1.bf16.msra.mxu0 0
    %54 = vmatprep.subr.bf16.mxu0 0
    %55 = vmatpush1.bf16.msra.mxu0 0
    %56 = vmatprep.subr.bf16.mxu0 0
    %57 = vmatpush1.bf16.msra.mxu0 0
    %58 = vmatprep.subr.bf16.mxu0 0
    %59 = vmatpush1.bf16.msra.mxu0 0
    %60 = vmatprep.subr.bf16.mxu0 0
    %61 = vmatpush1.bf16.msra.mxu0 0
    %62 = vmatprep.subr.bf16.mxu0 0
    %63 = vmatpush1.bf16.msra.mxu0 0
    %64 = vmatprep.subr.bf16.mxu0 0
    %65 = vmatpush1.bf16.msra.mxu0 0
    %66 = vmatprep.subr.bf16.mxu0 0
    %67 = vmatpush1.bf16.msra.mxu0 0
    %68 = vmatprep.subr.bf16.mxu0 0
    %69 = vmatpush1.bf16.msra.mxu0 0
    %70 = vmatprep.subr.bf16.mxu0 0
    %71 = vmatpush1.bf16.msra.mxu0 0
    %72 = vmatprep.subr.bf16.mxu0 0
    %73 = vmatpush1.bf16.msra.mxu0 0
    %74 = vmatprep.subr.bf16.mxu0 0
    %75 = vmatpush1.bf16.msra.mxu0 0
    %76 = vmatprep.subr.bf16.mxu0 0
    %77 = vmatpush1.bf16.msra.mxu0 0
    %78 = vmatprep.subr.bf16.mxu0 0
    %79 = vmatpush1.bf16.msra.mxu0 0
    %80 = vmatprep.mubr.bf16.mxu0 0
    %81 = vmatmul.mubr.bf16.gmra.mrb[0].mxu0 %v46
    %v82 = vpop.f32.mrb[0].mxu0
    %v83 = vadd.f32 %v30, %v82
    %v84 = vpop.f32.mrb[0].mxu0
    %v85 = vpop.f32.mrb[0].mxu0
    %v86 = vpop.f32.mrb[0].mxu0
    %87 = vdwg.mxu0
    %vm88 = vcmask 130048
    %v89 = vsel %vm88, %v83, -inf
    %90 = vmax.xlane.f32.xlu0 %v89
    %v91 = vpop.xlane.xlu0 %90
    %v92 = vsub.f32 %v83, %v91
    %v93 = vmul.f32 %v92, 1.442695
    %v94 = vpow.pop %v93
    %v95 = vsel %vm88, %v94, 0.0
    %96 = vadd.xlane.f32.xlu0 %v95
    %v97 = vpop.xlane.xlu0 %96
    %v98 = vrcp.pop %v97
    %v99 = vmul.f32 %v94, %v98
    %v100 = vpack.c.bf16 %v99, %v99
    %v101 = vld [vmem:[%s3] sm:$0xf]
    %v102 = vld [vmem:[%s3 + $0x4] sm:$0xf]
    %v105 = vunpack.c.l.b16 %v101
    %v106 = vunpack.c.l.b16 %v102
    %v107 = vpack.c.b16 %v106, %v105
    %v110 = vsel %vm88, %v100, 0
    %112 = vmatprep.subr.bf16.mxu0 0
    %113 = vmatpush1.bf16.msra.mxu0 %v107
    %114 = vmatprep.subr.bf16.mxu0 0
    %115 = vmatpush1.bf16.msra.mxu0 0
    %116 = vmatprep.subr.bf16.mxu0 0
    %117 = vmatpush1.bf16.msra.mxu0 0
    %118 = vmatprep.subr.bf16.mxu0 0
    %119 = vmatpush1.bf16.msra.mxu0 0
    %120 = vmatprep.subr.bf16.mxu0 0
    %121 = vmatpush1.bf16.msra.mxu0 0
    %122 = vmatprep.subr.bf16.mxu0 0
    %123 = vmatpush1.bf16.msra.mxu0 0
    %124 = vmatprep.subr.bf16.mxu0 0
    %125 = vmatpush1.bf16.msra.mxu0 0
    %126 = vmatprep.subr.bf16.mxu0 0
    %127 = vmatpush1.bf16.msra.mxu0 0
    %128 = vmatprep.subr.bf16.mxu0 0
    %129 = vmatpush1.bf16.msra.mxu0 0
    %130 = vmatprep.subr.bf16.mxu0 0
    %131 = vmatpush1.bf16.msra.mxu0 0
    %132 = vmatprep.subr.bf16.mxu0 0
    %133 = vmatpush1.bf16.msra.mxu0 0
    %134 = vmatprep.subr.bf16.mxu0 0
    %135 = vmatpush1.bf16.msra.mxu0 0
    %136 = vmatprep.subr.bf16.mxu0 0
    %137 = vmatpush1.bf16.msra.mxu0 0
    %138 = vmatprep.subr.bf16.mxu0 0
    %139 = vmatpush1.bf16.msra.mxu0 0
    %140 = vmatprep.subr.bf16.mxu0 0
    %141 = vmatpush1.bf16.msra.mxu0 0
    %142 = vmatprep.subr.bf16.mxu0 0
    %143 = vmatpush1.bf16.msra.mxu0 0
    %144 = vmatprep.mubr.bf16.mxu0 0
    %145 = vmatmul.mubr.bf16.gmra.mrb[0].mxu0 %v110
    %v146 = vpop.f32.mrb[0].mxu0
    %v147 = vadd.f32 0.0, %v146
    %v148 = vpop.f32.mrb[0].mxu0
    %v149 = vpop.f32.mrb[0].mxu0
    %v150 = vpop.f32.mrb[0].mxu0
    %151 = vdwg.mxu0
    %152 = vst.msk [vmem:[#allocation2] sm:$0xff] %vm44, %v147
    // Predicated region
    $region18: #{tpu_custom_call.1} parent=1 // pred_check
      _
    $region19: #{tpu_custom_call.1} parent=1 // pred_check_branch
      %154 = sbr.rel (0) target = $region21
    $region20: #{tpu_custom_call.1} parent=1 // pred_region
      %s156 = ssub.s32 128, 128
      %157 = vsyncadd [#allocation3], %s156
      %s159 = sshll.u32 [#allocation2], 4
      %s160 = int_to_ptr.vmem [resolvable:$true] %s159
      %162 = dma.vmem_to_hbm [thread:$0]  %s160, 128, %s4, [#allocation3]
    $region21: #{tpu_custom_call.1} parent=1 // pred_fallthru
      _
    // Predicated region
    $region22: #{tpu_custom_call.1} parent=1 // pred_check
      _
    $region23: #{tpu_custom_call.1} parent=1 // pred_check_branch
      %164 = sbr.rel (0) target = $region25
    $region24: #{tpu_custom_call.1} parent=1 // pred_region
      %165 = dma.done [#allocation3], 128
    $region25: #{tpu_custom_call.1} parent=1 // pred_fallthru
      _
    %166 = vsyncpa [#allocation3], 1

// kernel: tpu_custom_call.1
$region0: #{tpu_custom_call.1}
  #allocation0 [shape = 'u32[]', space=smem, size = 0x4, offset = 0x4, fixed_abs, tag = 'smem constant byte address 0x4 - core index']
  #allocation1 [shape = 'u32[144,128]{1,0:T(1,128)}', space=vmem, size = 0x12000, scoped, tag = 'internal scratch']
  %s0 = inlined_call_operand.vmem [shape: f32[8,32], index: 0, kind: input, shape index: {}]
  %s1 = inlined_call_operand.vmem [shape: bf16[32,16], index: 1, kind: input, shape index: {}]
  %s2 = inlined_call_operand.vmem [shape: f32[1,16], index: 2, kind: input, shape index: {}]
  %s3 = inlined_call_operand.vmem [shape: bf16[16,32], index: 3, kind: input, shape index: {}]
  %s4 = inlined_call_operand.hbm [shape: f32[8,32], index: 4, kind: output, shape index: {}]
  %s5 = sld [smem:[#allocation0]]
  $region26: #{tpu_custom_call.1} parent=0
    _
  %s7 = ssub.s32 1, %s5
  %s8 = scalar_select 0, %s7, %s5
  $region1: #{tpu_custom_call.1} parent=0
    #allocation2 [shape = 'u8[4096]{0}', space=vmem, size = 0x1000, scoped, tag = 'output window, operand 0, single buffered']
    #allocation3 [shape = 's32[1]{0}', space=sflag, size = 0x4, scoped, tag = 'scoped memory for tpu_custom_call.1']
    %9 = vsyncpa [#allocation3], 0
    // Predicated region
    $region2: #{tpu_custom_call.1} parent=1 // pred_check
      _
    $region3: #{tpu_custom_call.1} parent=1 // pred_check_branch
      %11 = sbr.rel (0) target = $region5
    $region4: #{tpu_custom_call.1} parent=1 // pred_region
      _
    $region5: #{tpu_custom_call.1} parent=1 // pred_fallthru
      _
    // Predicated region
    $region6: #{tpu_custom_call.1} parent=1 // pred_check
      _
    $region7: #{tpu_custom_call.1} parent=1 // pred_check_branch
      %13 = sbr.rel (0) target = $region9
    $region8: #{tpu_custom_call.1} parent=1 // pred_region
      _
    $region9: #{tpu_custom_call.1} parent=1 // pred_fallthru
      _
    // Predicated region
    $region10: #{tpu_custom_call.1} parent=1 // pred_check
      _
    $region11: #{tpu_custom_call.1} parent=1 // pred_check_branch
      %15 = sbr.rel (0) target = $region13
    $region12: #{tpu_custom_call.1} parent=1 // pred_region
      _
    $region13: #{tpu_custom_call.1} parent=1 // pred_fallthru
      _
    // Predicated region
    $region14: #{tpu_custom_call.1} parent=1 // pred_check
      _
    $region15: #{tpu_custom_call.1} parent=1 // pred_check_branch
      %17 = sbr.rel (0) target = $region17
    $region16: #{tpu_custom_call.1} parent=1 // pred_region
      _
    $region17: #{tpu_custom_call.1} parent=1 // pred_fallthru
      _
    %v19 = vld [vmem:[%s0] sm:$0xff]
    %v20 = vpack.c.bf16 %v19, %v19
    %v21 = vld [vmem:[%s1] sm:$0xf]
    %v22 = vld [vmem:[%s1 + $0x4] sm:$0xf]
    %v23 = vld [vmem:[%s1 + $0x8] sm:$0xf]
    %v24 = vld [vmem:[%s1 + $0xc] sm:$0xf]
    %v25 = vld [vmem:[%s2] sm:$0x1]
    %v27 = vlaneseq
    %v28 = vshrl.u32 %v27, 7
    %v29 = vsub.s32 0, %v28
    %v30 = vrot.slane %v25, %v29
    %v36 = vunpack.c.l.b16 %v21
    %v37 = vunpack.c.l.b16 %v22
    %v38 = vunpack.c.l.b16 %v23
    %v39 = vunpack.c.l.b16 %v24
    %v40 = vpack.c.b16 %v37, %v36
    %v41 = vpack.c.b16 %v39, %v38
    %vm44 = vcmask 261120
    %v46 = vsel %vm44, %v20, 0
    %48 = vmatprep.subr.bf16.mxu0 0
    %49 = vmatpush1.bf16.msra.mxu0 %v40
    %50 = vmatprep.subr.bf16.mxu0 0
    %51 = vmatpush1.bf16.msra.mxu0 %v41
    %52 = vmatprep.subr.bf16.mxu0 0
    %53 = vmatpush1.bf16.msra.mxu0 0
    %54 = vmatprep.subr.bf16.mxu0 0
    %55 = vmatpush1.bf16.msra.mxu0 0
    %56 = vmatprep.subr.bf16.mxu0 0
    %57 = vmatpush1.bf16.msra.mxu0 0
    %58 = vmatprep.subr.bf16.mxu0 0
    %59 = vmatpush1.bf16.msra.mxu0 0
    %60 = vmatprep.subr.bf16.mxu0 0
    %61 = vmatpush1.bf16.msra.mxu0 0
    %62 = vmatprep.subr.bf16.mxu0 0
    %63 = vmatpush1.bf16.msra.mxu0 0
    %64 = vmatprep.subr.bf16.mxu0 0
    %65 = vmatpush1.bf16.msra.mxu0 0
    %66 = vmatprep.subr.bf16.mxu0 0
    %67 = vmatpush1.bf16.msra.mxu0 0
    %68 = vmatprep.subr.bf16.mxu0 0
    %69 = vmatpush1.bf16.msra.mxu0 0
    %70 = vmatprep.subr.bf16.mxu0 0
    %71 = vmatpush1.bf16.msra.mxu0 0
    %72 = vmatprep.subr.bf16.mxu0 0
    %73 = vmatpush1.bf16.msra.mxu0 0
    %74 = vmatprep.subr.bf16.mxu0 0
    %75 = vmatpush1.bf16.msra.mxu0 0
    %76 = vmatprep.subr.bf16.mxu0 0
    %77 = vmatpush1.bf16.msra.mxu0 0
    %78 = vmatprep.subr.bf16.mxu0 0
    %79 = vmatpush1.bf16.msra.mxu0 0
    %80 = vmatprep.mubr.bf16.mxu0 0
    %81 = vmatmul.mubr.bf16.gmra.mrb[0].mxu0 %v46
    %v82 = vpop.f32.mrb[0].mxu0
    %v83 = vadd.f32 %v30, %v82
    %v84 = vpop.f32.mrb[0].mxu0
    %v85 = vpop.f32.mrb[0].mxu0
    %v86 = vpop.f32.mrb[0].mxu0
    %87 = vdwg.mxu0
    %vm88 = vcmask 130048
    %v89 = vsel %vm88, %v83, -inf
    %90 = vmax.xlane.f32.xlu0 %v89
    %v91 = vpop.xlane.xlu0 %90
    %v92 = vsub.f32 %v83, %v91
    %v93 = vmul.f32 %v92, 1.442695
    %v94 = vpow.pop %v93
    %v95 = vsel %vm88, %v94, 0.0
    %96 = vadd.xlane.f32.xlu0 %v95
    %v97 = vpop.xlane.xlu0 %96
    %v98 = vrcp.pop %v97
    %v99 = vmul.f32 %v94, %v98
    %v100 = vpack.c.bf16 %v99, %v99
    %v101 = vld [vmem:[%s3] sm:$0xf]
    %v102 = vld [vmem:[%s3 + $0x4] sm:$0xf]
    %v105 = vunpack.c.l.b16 %v101
    %v106 = vunpack.c.l.b16 %v102
    %v107 = vpack.c.b16 %v106, %v105
    %v110 = vsel %vm88, %v100, 0
    %112 = vmatprep.subr.bf16.mxu0 0
    %113 = vmatpush1.bf16.msra.mxu0 %v107
    %114 = vmatprep.subr.bf16.mxu0 0
    %115 = vmatpush1.bf16.msra.mxu0 0
    %116 = vmatprep.subr.bf16.mxu0 0
    %117 = vmatpush1.bf16.msra.mxu0 0
    %118 = vmatprep.subr.bf16.mxu0 0
    %119 = vmatpush1.bf16.msra.mxu0 0
    %120 = vmatprep.subr.bf16.mxu0 0
    %121 = vmatpush1.bf16.msra.mxu0 0
    %122 = vmatprep.subr.bf16.mxu0 0
    %123 = vmatpush1.bf16.msra.mxu0 0
    %124 = vmatprep.subr.bf16.mxu0 0
    %125 = vmatpush1.bf16.msra.mxu0 0
    %126 = vmatprep.subr.bf16.mxu0 0
    %127 = vmatpush1.bf16.msra.mxu0 0
    %128 = vmatprep.subr.bf16.mxu0 0
    %129 = vmatpush1.bf16.msra.mxu0 0
    %130 = vmatprep.subr.bf16.mxu0 0
    %131 = vmatpush1.bf16.msra.mxu0 0
    %132 = vmatprep.subr.bf16.mxu0 0
    %133 = vmatpush1.bf16.msra.mxu0 0
    %134 = vmatprep.subr.bf16.mxu0 0
    %135 = vmatpush1.bf16.msra.mxu0 0
    %136 = vmatprep.subr.bf16.mxu0 0
    %137 = vmatpush1.bf16.msra.mxu0 0
    %138 = vmatprep.subr.bf16.mxu0 0
    %139 = vmatpush1.bf16.msra.mxu0 0
    %140 = vmatprep.subr.bf16.mxu0 0
    %141 = vmatpush1.bf16.msra.mxu0 0
    %142 = vmatprep.subr.bf16.mxu0 0
    %143 = vmatpush1.bf16.msra.mxu0 0
    %144 = vmatprep.mubr.bf16.mxu0 0
    %145 = vmatmul.mubr.bf16.gmra.mrb[0].mxu0 %v110
    %v146 = vpop.f32.mrb[0].mxu0
    %v147 = vadd.f32 0.0, %v146
    %v148 = vpop.f32.mrb[0].mxu0
    %v149 = vpop.f32.mrb[0].mxu0
    %v150 = vpop.f32.mrb[0].mxu0
    %151 = vdwg.mxu0
    %152 = vst.msk [vmem:[#allocation2] sm:$0xff] %vm44, %v147
    // Predicated region
    $region18: #{tpu_custom_call.1} parent=1 // pred_check
      _
    $region19: #{tpu_custom_call.1} parent=1 // pred_check_branch
      %154 = sbr.rel (0) target = $region21
    $region20: #{tpu_custom_call.1} parent=1 // pred_region
      %s156 = ssub.s32 128, 128
      %157 = vsyncadd [#allocation3], %s156
      %s159 = sshll.u32 [#allocation2], 4
      %s160 = int_to_ptr.vmem [resolvable:$true] %s159
      %162 = dma.vmem_to_hbm [thread:$0]  %s160, 128, %s4, [#allocation3]
    $region21: #{tpu_custom_call.1} parent=1 // pred_fallthru
      _
    // Predicated region
    $region22: #{tpu_custom_call.1} parent=1 // pred_check
      _
    $region23: #{tpu_custom_call.1} parent=1 // pred_check_branch
      %164 = sbr.rel (0) target = $region25
    $region24: #{tpu_custom_call.1} parent=1 // pred_region
      %165 = dma.done [#allocation3], 128
    $region25: #{tpu_custom_call.1} parent=1 // pred_fallthru
      _
    %166 = vsyncpa [#allocation3], 1

</llo_original>
